<compile_context>
chip_gen: v6e
topology: v6e:2x2x1
jax: 0.10.0
libtpu: 0.0.40
codegen_flags: <defaults>
</compile_context>

<pallas_src>
import jax
import jax.numpy as jnp
from jax.experimental import pallas as pl
from jax.experimental.pallas import tpu as pltpu


def _cat_kernel(x_ref, cat_ref):
    # x_ref block: (B, 3, hw_tile); cat_ref block: (B, 4, hw_tile)
    x = x_ref[...]
    # Single full-block store: channels [0,1,2] followed by a duplicate of ch 0.
    cat_ref[...] = jnp.concatenate([x, x[:, 0:1, :]], axis=1)


def _choose_hw_tile(HW, B, C, itemsize):
    """Largest lane tile that divides HW, is a multiple of 128, and keeps one
    (input block + output block) pair ≲ 4 MiB (so 2x double buffering stays
    far under the default scoped VMEM on v5e/v6e/v7x)."""
    if HW % 128 != 0:
        # Full-extent block is always legal when block dim == array dim.
        return HW
    per_lane_bytes = B * (2 * C + 1) * itemsize          # 3 in + 4 out channels
    budget = 4 * 1024 * 1024
    max_lanes = max(128, (budget // per_lane_bytes) // 128 * 128)
    tile = min(HW, max_lanes)
    while HW % tile != 0:
        tile -= 128
    return tile


def model_forward(v0):
    B, C, H, W = v0.shape
    assert C == 3, "split sizes [1,1,1] require 3 channels"
    HW = H * W
    x = v0.reshape(B, C, HW)                              # lane-dense layout

    hw_tile = _choose_hw_tile(HW, B, C, jnp.dtype(v0.dtype).itemsize)
    grid = (HW // hw_tile,)                               # (1,) for small inputs

    cat_flat = pl.pallas_call(
        _cat_kernel,
        out_shape=jax.ShapeDtypeStruct((B, C + 1, HW), v0.dtype),
        grid=grid,
        in_specs=[pl.BlockSpec((B, C, hw_tile), lambda s: (0, 0, s))],
        out_specs=pl.BlockSpec((B, C + 1, hw_tile), lambda s: (0, 0, s)),
        compiler_params=pltpu.CompilerParams(
            dimension_semantics=("parallel",)),
    )(x)

    cat_out = cat_flat.reshape(B, C + 1, H, W)

    # split-with-sizes [1, 1, 1] along dim=1: pure views of v0, no kernel work.
    splits = (v0[:, 0:1], v0[:, 1:2], v0[:, 2:3])
    return cat_out, splits


if __name__ == "__main__":
    key = jax.random.PRNGKey(0)
    B, C, H, W = 2, 3, 16, 16
    v0 = jax.random.normal(key, (B, C, H, W), dtype=jnp.float32)

    cat_out, splits = jax.block_until_ready(model_forward(v0))

    # Pure-JAX reference check.
    ref_cat = jnp.concatenate([v0, v0[:, 0:1]], axis=1)
    ref_splits = (v0[:, 0:1], v0[:, 1:2], v0[:, 2:3])

    assert cat_out.shape == (B, 4, H, W)
    assert jnp.allclose(cat_out, ref_cat)
    for got, ref in zip(splits, ref_splits):
        assert got.shape == (B, 1, H, W)
        assert jnp.allclose(got, ref)

    print("KERNEL_OK")
</pallas_src>

<mosaic_0001>
module attributes {stable_mosaic.version = 11 : i64} {
  func.func @_cat_kernel(%arg0: i32, %arg1: memref<2x3x256xf32, #tpu.memory_space<vmem>>, %arg2: memref<2x4x256xf32, #tpu.memory_space<vmem>>) attributes {dimension_semantics = [#tpu.dimension_semantics<parallel>], iteration_bounds = array<i64: 1>, scalar_prefetch = 0 : i64, scratch_operands = 0 : i64, tpu.core_type = #tpu.core_type<tc>, window_params = [{transform_indices = @transform_0, window_bounds = array<i64: 2, 3, 256>}, {transform_indices = @transform_1, window_bounds = array<i64: 2, 4, 256>}]} {
    %c0 = arith.constant 0 : index
    %c0_0 = arith.constant 0 : index
    %c0_1 = arith.constant 0 : index
    %0 = vector.load %arg1[%c0, %c0_0, %c0_1] : memref<2x3x256xf32, #tpu.memory_space<vmem>>, vector<2x3x256xf32>
    %1 = vector.extract_strided_slice %0 {offsets = [0, 0, 0], sizes = [2, 1, 256], strides = [1, 1, 1]} : vector<2x3x256xf32> to vector<2x1x256xf32>
    %2 = tpu.concatenate %0, %1 in 1 : vector<2x3x256xf32>, vector<2x1x256xf32> -> vector<2x4x256xf32>
    %c0_2 = arith.constant 0 : index
    %c0_3 = arith.constant 0 : index
    %c0_4 = arith.constant 0 : index
    %3 = vector.load %arg2[%c0_2, %c0_3, %c0_4] : memref<2x4x256xf32, #tpu.memory_space<vmem>>, vector<2x4x256xf32>
    tpu.vector_store %arg2[%c0_2, %c0_3, %c0_4], %2 {strides = array<i32>} : memref<2x4x256xf32, #tpu.memory_space<vmem>>, vector<2x4x256xf32>,
    return
  }
  func.func @transform_0(%arg0: i32) -> (i32, i32, i32) {
    %c0_i32 = arith.constant 0 : i32
    %c0_i32_0 = arith.constant 0 : i32
    %c0_i32_1 = arith.constant 0 : i32
    return %c0_i32, %c0_i32_0, %arg0 : i32, i32, i32
  }
  func.func @transform_1(%arg0: i32) -> (i32, i32, i32) {
    %c0_i32 = arith.constant 0 : i32
    %c0_i32_0 = arith.constant 0 : i32
    %c0_i32_1 = arith.constant 0 : i32
    return %c0_i32, %c0_i32_0, %arg0 : i32, i32, i32
  }
}

</mosaic_0001>

<llo_original>
// kernel: tpu_custom_call.1
$region0: #{tpu_custom_call.1}
  #allocation0 [shape = 'u32[]', space=smem, size = 0x4, offset = 0x4, fixed_abs, tag = 'smem constant byte address 0x4 - core index']
  #allocation1 [shape = 'u32[144,128]{1,0:T(1,128)}', space=vmem, size = 0x12000, scoped, tag = 'internal scratch']
  %s0 = inlined_call_operand.vmem [shape: f32[2,3,256], index: 0, kind: input, shape index: {}]
  %s1 = inlined_call_operand.hbm [shape: f32[2,4,256], index: 1, kind: output, shape index: {}]
  %s2 = sld [smem:[#allocation0]]
  $region14: #{tpu_custom_call.1} parent=0
    _
  %s4 = ssub.s32 1, %s2
  %s5 = scalar_select 0, %s4, %s2
  $region1: #{tpu_custom_call.1} parent=0
    #allocation2 [shape = 'u8[8192]{0}', space=vmem, size = 0x2000, scoped, tag = 'output window, operand 0, single buffered']
    #allocation3 [shape = 's32[1]{0}', space=sflag, size = 0x4, scoped, tag = 'scoped memory for tpu_custom_call.1']
    %6 = vsyncpa [#allocation3], 0
    // Predicated region
    $region2: #{tpu_custom_call.1} parent=1 // pred_check
      _
    $region3: #{tpu_custom_call.1} parent=1 // pred_check_branch
      %8 = sbr.rel (0) target = $region5
    $region4: #{tpu_custom_call.1} parent=1 // pred_region
      _
    $region5: #{tpu_custom_call.1} parent=1 // pred_fallthru
      _
    %v9 = vld [vmem:[%s0] sm:$0x77]
    %v10 = vld [vmem:[%s0 + $0x8] sm:$0x77]
    %v13 = vcombine.high %v9, %v9
    %v14 = vcombine.high %v10, %v10
    %v17 = vlaneseq
    %v18 = vshrl.u32 %v17, 7
    %v19 = vsub.s32 0, %v18
    %v20 = vrot.slane %v9, %v19
    %v21 = vlaneseq
    %v22 = vshrl.u32 %v21, 7
    %v23 = vsub.s32 4, %v22
    %v24 = vrot.slane %v9, %v23
    %v25 = vlaneseq
    %v26 = vshrl.u32 %v25, 7
    %v27 = vsub.s32 0, %v26
    %v28 = vrot.slane %v10, %v27
    %v29 = vlaneseq
    %v30 = vshrl.u32 %v29, 7
    %v31 = vsub.s32 4, %v30
    %v32 = vrot.slane %v10, %v31
    %vm37 = vcmask 1042432
    %v38 = vsel %vm37, %v9, %v20
    %v39 = vsel %vm37, %v13, %v24
    %v40 = vsel %vm37, %v10, %v28
    %v41 = vsel %vm37, %v14, %v32
    %v46 = vcombine.low %v38, %v39
    %v47 = vcombine.low %v40, %v41
    %50 = vst [vmem:[#allocation2] sm:$0xff] %v46
    %51 = vst [vmem:[#allocation2 + $0x8] sm:$0xff] %v47
    // Predicated region
    $region6: #{tpu_custom_call.1} parent=1 // pred_check
      _
    $region7: #{tpu_custom_call.1} parent=1 // pred_check_branch
      %53 = sbr.rel (0) target = $region9
    $region8: #{tpu_custom_call.1} parent=1 // pred_region
      %s55 = ssub.s32 256, 256
      %56 = vsyncadd [#allocation3], %s55
      %s57 = sshll.u32 [#allocation2], 4
      %s58 = int_to_ptr.vmem [resolvable:$true] %s57
      %63 = dma.vmem_to_hbm [thread:$0]  %s58, 256, %s1, [#allocation3], 128, 128, 8
    $region9: #{tpu_custom_call.1} parent=1 // pred_fallthru
      _
    // Predicated region
    $region10: #{tpu_custom_call.1} parent=1 // pred_check
      _
    $region11: #{tpu_custom_call.1} parent=1 // pred_check_branch
      %65 = sbr.rel (0) target = $region13
    $region12: #{tpu_custom_call.1} parent=1 // pred_region
      %66 = dma.done [#allocation3], 256
    $region13: #{tpu_custom_call.1} parent=1 // pred_fallthru
      _
    %67 = vsyncpa [#allocation3], 1

</llo_original>
